<compile_context>
chip_gen: v5e
topology: v5e:2x2
jax: 0.10.0
libtpu: 0.0.40
codegen_flags: <defaults>
</compile_context>

<pallas_src>
import functools

import jax
import jax.numpy as jnp
from jax.experimental import pallas as pl
from jax.experimental.pallas import tpu as pltpu


def _layernorm_kernel(x_ref, a_ref, b_ref, o_ref, *, eps, features):
    # x_ref: (row_tile, features); a_ref / b_ref: (1, features)
    x = x_ref[...].astype(jnp.float32)
    a = a_ref[...].astype(jnp.float32)
    b = b_ref[...].astype(jnp.float32)

    mean = jnp.sum(x, axis=-1, keepdims=True) * (1.0 / features)
    diff = x - mean

    # Unbiased variance (Bessel's correction), matching torch.Tensor.std.
    # features == 1 gives NaN in torch; guard only against a trace-time
    # division by zero (result is still degenerate for that edge case).
    bessel = max(features - 1, 1)
    var = jnp.sum(diff * diff, axis=-1, keepdims=True) * (1.0 / bessel)
    std = jnp.sqrt(var)

    denom = std + eps
    # EUP reciprocal (otherwise-idle slot) + one Newton step for f32 accuracy.
    inv = pl.reciprocal(denom, approx=True)
    inv = inv * (2.0 - denom * inv)

    y = diff * (inv * a) + b
    o_ref[...] = y.astype(o_ref.dtype)


def _pick_row_tile(rows, features, dtype_bytes):
    """Pick a row tile sized to VMEM; returns (row_tile, grid_rows)."""
    # bf16 packs (16, 128) per vreg -> keep the tile a multiple of 16.
    mult = 16 if dtype_bytes == 2 else 8

    # 2 input buffers + 2 output buffers (double buffering), each
    # (row_tile, features). Budget ~32 MiB so it also fits v7x's 64 MiB VMEM.
    budget = 32 * 1024 * 1024
    per_row = 4 * features * dtype_bytes
    tile = budget // max(per_row, 1)
    tile = int(max(mult, min(tile, 1024)))
    tile = (tile // mult) * mult

    # Keep >= 2 grid steps when rows are plentiful so a dual-TensorCore chip
    # (v7x) can shard the parallel row axis across both cores.
    if rows > 2 * mult:
        half = max(mult, ((rows + 1) // 2 // mult) * mult)
        tile = min(tile, half)

    if rows <= tile:
        # Single block covering all rows (block == full array dim is legal
        # even if rows is not a multiple of 8).
        return rows, 1
    return tile, pl.cdiv(rows, tile)


def layer_norm(x, a, b, *, eps=1e-6):
    """LayerNorm over the last axis of x. a, b have shape (features,)."""
    features = x.shape[-1]
    orig_shape = x.shape
    rows = 1
    for d in orig_shape[:-1]:
        rows *= d
    x2 = x.reshape(rows, features)       # metadata-only reshape, no HBM copy

    a2 = a.reshape(1, features)
    b2 = b.reshape(1, features)

    dtype_bytes = jnp.dtype(x.dtype).itemsize
    row_tile, grid_rows = _pick_row_tile(rows, features, dtype_bytes)

    # Raise the scoped VMEM limit enough for the chosen tiles; cap at 56 MiB so
    # the same setting is safe on v7x (64 MiB physical per TensorCore).
    tile_bytes = 4 * row_tile * features * dtype_bytes
    vmem_limit = int(min(56 * 2**20, max(32 * 2**20, tile_bytes + 4 * 2**20)))

    # NOTE: if the production feature dim is not a multiple of 128, lane
    # utilization of the stores is reduced; the last block dim equals the full
    # feature dim, so it stays correct either way.
    out = pl.pallas_call(
        functools.partial(_layernorm_kernel, eps=eps, features=features),
        out_shape=jax.ShapeDtypeStruct((rows, features), x.dtype),
        grid_spec=pltpu.PrefetchScalarGridSpec(
            num_scalar_prefetch=0,
            grid=(grid_rows,),
            in_specs=[
                pl.BlockSpec((row_tile, features), lambda i: (i, 0)),
                pl.BlockSpec((1, features), lambda i: (0, 0)),
                pl.BlockSpec((1, features), lambda i: (0, 0)),
            ],
            out_specs=pl.BlockSpec((row_tile, features), lambda i: (i, 0)),
        ),
        compiler_params=pltpu.CompilerParams(
            dimension_semantics=("parallel",),
            vmem_limit_bytes=vmem_limit,
        ),
    )(x2, a2, b2)

    return out.reshape(orig_shape)


def layer_norm_ref(x, a, b, eps=1e-6):
    xf = x.astype(jnp.float32)
    mean = jnp.mean(xf, axis=-1, keepdims=True)
    diff = xf - mean
    var = jnp.sum(diff * diff, axis=-1, keepdims=True) / (x.shape[-1] - 1)
    std = jnp.sqrt(var)
    return (a * diff / (std + eps) + b).astype(x.dtype)


if __name__ == "__main__":
    key = jax.random.PRNGKey(0)
    batch, seq, features = 2, 8, 32

    x = jax.random.normal(key, (batch, seq, features), dtype=jnp.float32)
    # Deterministic parameter init matching nn.Parameter(torch.ones / torch.zeros)
    a = jnp.ones((features,), dtype=jnp.float32)
    b = jnp.zeros((features,), dtype=jnp.float32)

    out = layer_norm(x, a, b, eps=1e-6)
    out = jax.block_until_ready(out)

    ref = layer_norm_ref(x, a, b, eps=1e-6)
    assert out.shape == x.shape
    assert jnp.allclose(out, ref, atol=1e-5, rtol=1e-5)

    print("KERNEL_OK")
</pallas_src>

<mosaic_0001>
module attributes {stable_mosaic.version = 11 : i64} {
  func.func @_layernorm_kernel(%arg0: i32, %arg1: memref<16x32xf32, #tpu.memory_space<vmem>>, %arg2: memref<1x32xf32, #tpu.memory_space<vmem>>, %arg3: memref<1x32xf32, #tpu.memory_space<vmem>>, %arg4: memref<16x32xf32, #tpu.memory_space<vmem>>) attributes {dimension_semantics = [#tpu.dimension_semantics<parallel>], iteration_bounds = array<i64: 1>, scalar_prefetch = 0 : i64, scratch_operands = 0 : i64, tpu.core_type = #tpu.core_type<tc>, window_params = [{transform_indices = @transform_0, window_bounds = array<i64: 16, 32>}, {pipeline_mode = #tpu.pipeline_mode<synchronous>, transform_indices = @transform_1, window_bounds = array<i64: 1, 32>}, {pipeline_mode = #tpu.pipeline_mode<synchronous>, transform_indices = @transform_2, window_bounds = array<i64: 1, 32>}, {transform_indices = @transform_3, window_bounds = array<i64: 16, 32>}]} {
    %c0 = arith.constant 0 : index
    %c0_0 = arith.constant 0 : index
    %0 = vector.load %arg1[%c0, %c0_0] : memref<16x32xf32, #tpu.memory_space<vmem>>, vector<16x32xf32>
    %c0_1 = arith.constant 0 : index
    %c0_2 = arith.constant 0 : index
    %1 = vector.load %arg2[%c0_1, %c0_2] : memref<1x32xf32, #tpu.memory_space<vmem>>, vector<1x32xf32>
    %c0_3 = arith.constant 0 : index
    %c0_4 = arith.constant 0 : index
    %2 = vector.load %arg3[%c0_3, %c0_4] : memref<1x32xf32, #tpu.memory_space<vmem>>, vector<1x32xf32>
    %cst = arith.constant dense<0.000000e+00> : vector<16xf32>
    %3 = vector.multi_reduction <add>, %0, %cst [1] : vector<16x32xf32> to vector<16xf32>
    %4 = vector.shape_cast %3 : vector<16xf32> to vector<16x1xf32>
    %cst_5 = arith.constant 3.125000e-02 : f32
    %5 = vector.broadcast %cst_5 : f32 to vector<16x1xf32>
    %6 = arith.mulf %4, %5 : vector<16x1xf32>
    %7 = vector.broadcast %6 : vector<16x1xf32> to vector<16x32xf32>
    %8 = arith.subf %0, %7 : vector<16x32xf32>
    %9 = arith.mulf %8, %8 : vector<16x32xf32>
    %cst_6 = arith.constant dense<0.000000e+00> : vector<16xf32>
    %10 = vector.multi_reduction <add>, %9, %cst_6 [1] : vector<16x32xf32> to vector<16xf32>
    %11 = vector.shape_cast %10 : vector<16xf32> to vector<16x1xf32>
    %cst_7 = arith.constant 0.0322580636 : f32
    %12 = vector.broadcast %cst_7 : f32 to vector<16x1xf32>
    %13 = arith.mulf %11, %12 : vector<16x1xf32>
    %14 = math.sqrt %13 : vector<16x1xf32>
    %cst_8 = arith.constant 9.99999997E-7 : f32
    %15 = vector.broadcast %cst_8 : f32 to vector<16x1xf32>
    %16 = arith.addf %14, %15 : vector<16x1xf32>
    %17 = tpu.reciprocal %16 {approx = true} : vector<16x1xf32> -> vector<16x1xf32>
    %18 = arith.mulf %16, %17 : vector<16x1xf32>
    %cst_9 = arith.constant 2.000000e+00 : f32
    %19 = vector.broadcast %cst_9 : f32 to vector<16x1xf32>
    %20 = arith.subf %19, %18 : vector<16x1xf32>
    %21 = arith.mulf %17, %20 : vector<16x1xf32>
    %22 = vector.broadcast %21 : vector<16x1xf32> to vector<16x32xf32>
    %23 = vector.broadcast %1 : vector<1x32xf32> to vector<16x32xf32>
    %24 = arith.mulf %22, %23 : vector<16x32xf32>
    %25 = arith.mulf %8, %24 : vector<16x32xf32>
    %26 = vector.broadcast %2 : vector<1x32xf32> to vector<16x32xf32>
    %27 = arith.addf %25, %26 : vector<16x32xf32>
    %c0_10 = arith.constant 0 : index
    %c0_11 = arith.constant 0 : index
    %28 = vector.load %arg4[%c0_10, %c0_11] : memref<16x32xf32, #tpu.memory_space<vmem>>, vector<16x32xf32>
    tpu.vector_store %arg4[%c0_10, %c0_11], %27 {strides = array<i32>} : memref<16x32xf32, #tpu.memory_space<vmem>>, vector<16x32xf32>,
    return
  }
  func.func @transform_0(%arg0: i32) -> (i32, i32) {
    %c0_i32 = arith.constant 0 : i32
    %c0_i32_0 = arith.constant 0 : i32
    return %arg0, %c0_i32 : i32, i32
  }
  func.func @transform_1(%arg0: i32) -> (i32, i32) {
    %c0_i32 = arith.constant 0 : i32
    %c0_i32_0 = arith.constant 0 : i32
    %c0_i32_1 = arith.constant 0 : i32
    return %c0_i32, %c0_i32_0 : i32, i32
  }
  func.func @transform_2(%arg0: i32) -> (i32, i32) {
    %c0_i32 = arith.constant 0 : i32
    %c0_i32_0 = arith.constant 0 : i32
    %c0_i32_1 = arith.constant 0 : i32
    return %c0_i32, %c0_i32_0 : i32, i32
  }
  func.func @transform_3(%arg0: i32) -> (i32, i32) {
    %c0_i32 = arith.constant 0 : i32
    %c0_i32_0 = arith.constant 0 : i32
    return %arg0, %c0_i32 : i32, i32
  }
}

</mosaic_0001>

<llo_original>
// kernel: tpu_custom_call.1
$region0: #{tpu_custom_call.1}
  #allocation0 [shape = 'u32[]', space=smem, size = 0x4, offset = 0x4, fixed_abs, tag = 'smem constant byte address 0x4 - core index']
  #allocation1 [shape = 'u32[72,128]{1,0:T(1,128)}', space=vmem, size = 0x9000, scoped, tag = 'internal scratch']
  %s0 = inlined_call_operand.hbm [shape: f32[16,32], index: 0, kind: input, shape index: {}]
  %s1 = inlined_call_operand.hbm [shape: f32[1,32], index: 1, kind: input, shape index: {}]
  %s2 = inlined_call_operand.vmem [shape: f32[1,32], index: 2, kind: input, shape index: {}]
  %s3 = inlined_call_operand.hbm [shape: f32[16,32], index: 3, kind: output, shape index: {}]
  %s4 = sld [smem:[#allocation0]]
  $region30: #{tpu_custom_call.1} parent=0
    _
  %s6 = ssub.s32 1, %s4
  %s7 = scalar_select 0, %s6, %s4
  $region1: #{tpu_custom_call.1} parent=0
    #allocation2 [shape = 'u8[8192]{0}', space=vmem, size = 0x2000, scoped, tag = 'input window, operand 0, single buffered']
    #allocation3 [shape = 's32[1]{0}', space=sflag, size = 0x4, scoped, tag = 'scoped memory for tpu_custom_call.1']
    #allocation4 [shape = 's32[1]{0}', space=sflag, size = 0x4, scoped, tag = 'scoped memory for tpu_custom_call.1']
    #allocation5 [shape = 'u8[512]{0}', space=vmem, size = 0x400, scoped, tag = 'input window, operand 1, single buffered']
    #allocation6 [shape = 's32[1]{0}', space=sflag, size = 0x4, scoped, tag = 'scoped memory for tpu_custom_call.1']
    #allocation7 [shape = 'u8[8192]{0}', space=vmem, size = 0x2000, scoped, tag = 'output window, operand 0, single buffered']
    %8 = vsyncpa [#allocation3], 0
    %9 = vsyncpa [#allocation6], 0
    %10 = vsyncpa [#allocation4], 0
    // Predicated region
    $region2: #{tpu_custom_call.1} parent=1 // pred_check
      _
    $region3: #{tpu_custom_call.1} parent=1 // pred_check_branch
      %12 = sbr.rel (0) target = $region5
    $region4: #{tpu_custom_call.1} parent=1 // pred_region
      %14 = vsyncadd [#allocation3], 0
      %s15 = sshll.u32 %s0, 4
      %s16 = int_to_ptr.hbm [resolvable:$true] %s15
      %s17 = sshll.u32 [#allocation2], 4
      %s18 = int_to_ptr.vmem [resolvable:$true] %s17
      %23 = dma.hbm_to_vmem [thread:$0]  %s16, 256, %s18, [#allocation3], 128, 128, 8
    $region5: #{tpu_custom_call.1} parent=1 // pred_fallthru
      _
    // Predicated region
    $region6: #{tpu_custom_call.1} parent=1 // pred_check
      _
    $region7: #{tpu_custom_call.1} parent=1 // pred_check_branch
      %25 = sbr.rel (0) target = $region9
    $region8: #{tpu_custom_call.1} parent=1 // pred_region
      %27 = vsyncadd [#allocation6], 0
      %s29 = sshll.u32 %s1, 4
      %s30 = int_to_ptr.hbm [resolvable:$true] %s29
      %s31 = sshll.u32 [#allocation5], 4
      %s32 = int_to_ptr.vmem [resolvable:$true] %s31
      %34 = dma.hbm_to_vmem [thread:$0]  %s30, 16, %s32, [#allocation6]
    $region9: #{tpu_custom_call.1} parent=1 // pred_fallthru
      _
    // Predicated region
    $region10: #{tpu_custom_call.1} parent=1 // pred_check
      _
    $region11: #{tpu_custom_call.1} parent=1 // pred_check_branch
      %36 = sbr.rel (0) target = $region13
    $region12: #{tpu_custom_call.1} parent=1 // pred_region
      _
    $region13: #{tpu_custom_call.1} parent=1 // pred_fallthru
      _
    // Predicated region
    $region14: #{tpu_custom_call.1} parent=1 // pred_check
      _
    $region15: #{tpu_custom_call.1} parent=1 // pred_check_branch
      %38 = sbr.rel (0) target = $region17
    $region16: #{tpu_custom_call.1} parent=1 // pred_region
      %40 = dma.done [#allocation3], 256
    $region17: #{tpu_custom_call.1} parent=1 // pred_fallthru
      _
    // Predicated region
    $region18: #{tpu_custom_call.1} parent=1 // pred_check
      _
    $region19: #{tpu_custom_call.1} parent=1 // pred_check_branch
      %42 = sbr.rel (0) target = $region21
    $region20: #{tpu_custom_call.1} parent=1 // pred_region
      %44 = dma.done [#allocation6], 16
    $region21: #{tpu_custom_call.1} parent=1 // pred_fallthru
      _
    %v45 = vld [vmem:[#allocation2] sm:$0xff]
    %v46 = vld [vmem:[#allocation2 + $0x8] sm:$0xff]
    %v47 = vld [vmem:[#allocation5] sm:$0x1]
    %v48 = vld [vmem:[%s2] sm:$0x1]
    %vm49 = vcmask 261120
    %v50 = vsel %vm49, %v45, 0.0
    %51 = vadd.xlane.f32.xlu0 %v50
    %v52 = vpop.xlane.xlu0 %51
    %v53 = vsel %vm49, %v46, 0.0
    %54 = vadd.xlane.f32.xlu0 %v53
    %v55 = vpop.xlane.xlu0 %54
    %v56 = vmul.f32 %v52, 0.03125
    %v57 = vmul.f32 %v55, 0.03125
    %v58 = vsub.f32 %v45, %v56
    %v59 = vsub.f32 %v46, %v57
    %v60 = vmul.f32 %v58, %v58
    %v61 = vmul.f32 %v59, %v59
    %v62 = vsel %vm49, %v60, 0.0
    %63 = vadd.xlane.f32.xlu0 %v62
    %v64 = vpop.xlane.xlu0 %63
    %v65 = vsel %vm49, %v61, 0.0
    %66 = vadd.xlane.f32.xlu0 %v65
    %v67 = vpop.xlane.xlu0 %66
    %v68 = vmul.f32 %v64, 0.032258064
    %v69 = vmul.f32 %v67, 0.032258064
    %v70 = vrsqrt.pop %v68
    %v71 = vmul.f32 %v70, %v68
    %v72 = vmul.f32 %v71, %v70
    %v73 = vmul.f32 0.5, %v72
    %v74 = vsub.f32 1.5, %v73
    %v75 = vmul.f32 %v70, %v74
    %v76 = vmul.f32 %v68, %v75
    %vm77 = vcmp.eq.f32.partialorder %v68, inf
    %v78 = vsel %vm77, %v68, %v76
    %vm79 = vcmp.eq.f32.partialorder %v68, 0.0
    %v80 = vand.u32 %v68, 2147483648
    %v81 = vsel %vm79, %v80, %v78
    %v82 = vrsqrt.pop %v69
    %v83 = vmul.f32 %v82, %v69
    %v84 = vmul.f32 %v83, %v82
    %v85 = vmul.f32 0.5, %v84
    %v86 = vsub.f32 1.5, %v85
    %v87 = vmul.f32 %v82, %v86
    %v88 = vmul.f32 %v69, %v87
    %vm89 = vcmp.eq.f32.partialorder %v69, inf
    %v90 = vsel %vm89, %v69, %v88
    %vm91 = vcmp.eq.f32.partialorder %v69, 0.0
    %v92 = vand.u32 %v69, 2147483648
    %v93 = vsel %vm91, %v92, %v90
    %v94 = vadd.f32 %v81, 1e-06
    %v95 = vadd.f32 %v93, 1e-06
    %v96 = vrcp.pop %v94
    %v97 = vrcp.pop %v95
    %v98 = vmul.f32 %v94, %v96
    %v99 = vmul.f32 %v95, %v97
    %v100 = vsub.f32 2.0, %v98
    %v101 = vsub.f32 2.0, %v99
    %v102 = vmul.f32 %v96, %v100
    %v103 = vmul.f32 %v97, %v101
    %v105 = vperm.slane %v47, 0
    %v107 = vmul.f32 %v102, %v105
    %v108 = vmul.f32 %v103, %v105
    %v109 = vmul.f32 %v58, %v107
    %v110 = vmul.f32 %v59, %v108
    %v112 = vperm.slane %v48, 0
    %v114 = vadd.f32 %v109, %v112
    %v115 = vadd.f32 %v110, %v112
    %116 = vst.msk [vmem:[#allocation7] sm:$0xff] %vm49, %v114
    %117 = vst.msk [vmem:[#allocation7 + $0x8] sm:$0xff] %vm49, %v115
    // Predicated region
    $region22: #{tpu_custom_call.1} parent=1 // pred_check
      _
    $region23: #{tpu_custom_call.1} parent=1 // pred_check_branch
      %119 = sbr.rel (0) target = $region25
    $region24: #{tpu_custom_call.1} parent=1 // pred_region
      %121 = vsyncadd [#allocation4], 0
      %s122 = sshll.u32 [#allocation7], 4
      %s123 = int_to_ptr.vmem [resolvable:$true] %s122
      %s124 = sshll.u32 %s3, 4
      %s125 = int_to_ptr.hbm [resolvable:$true] %s124
      %130 = dma.vmem_to_hbm [thread:$0]  %s123, 256, %s125, [#allocation4], 128, 128, 8
    $region25: #{tpu_custom_call.1} parent=1 // pred_fallthru
      _
    // Predicated region
    $region26: #{tpu_custom_call.1} parent=1 // pred_check
      _
    $region27: #{tpu_custom_call.1} parent=1 // pred_check_branch
      %132 = sbr.rel (0) target = $region29
    $region28: #{tpu_custom_call.1} parent=1 // pred_region
      %134 = dma.done [#allocation4], 256
    $region29: #{tpu_custom_call.1} parent=1 // pred_fallthru
      _
    %135 = vsyncpa [#allocation3], 1
    %136 = vsyncpa [#allocation6], 1
    %137 = vsyncpa [#allocation4], 1

</llo_original>
